<compile_context>
chip_gen: v6e
topology: v6e:2x2x1
jax: 0.10.0
libtpu: 0.0.40
codegen_flags: <defaults>
</compile_context>

<pallas_src>
import jax
import jax.numpy as jnp
from jax.experimental import pallas as pl
from jax.experimental.pallas import tpu as pltpu


def _round_up(x, m):
    return ((x + m - 1) // m) * m


def _vmem_capacity_bytes():
    try:
        return int(pltpu.get_tpu_info().vmem_capacity_bytes)
    except Exception:
        return 64 * 1024 * 1024  # conservative fallback (v7x per-TC VMEM)


def _embed_onehot_kernel(idx_ref, table_ref, out_ref, acc_ref):
    # idx_ref:   (T, 1)    int32 token ids for this chunk (clamped, padded)
    # table_ref: (tv, Dp)  one vocab block of the (padded) embedding table
    # out_ref:   (T, Dp)   gathered embedding rows for this chunk
    # acc_ref:   (T, Dp)   f32 accumulator, resident across the vocab axis
    k = pl.program_id(1)

    @pl.when(k == 0)
    def _init():
        acc_ref[...] = jnp.zeros_like(acc_ref)

    t = out_ref.shape[0]
    tv = table_ref.shape[0]
    local_ids = idx_ref[...] - k * tv                           # (T, 1)
    iota_v = jax.lax.broadcasted_iota(jnp.int32, (t, tv), 1)    # (T, tv)
    onehot = (local_ids == iota_v).astype(table_ref.dtype)      # exact 0/1
    # One-hot select on the MXU: each output row is exactly one table row.
    acc_ref[...] += jnp.dot(
        onehot, table_ref[...], preferred_element_type=jnp.float32
    )

    @pl.when(k == pl.num_programs(1) - 1)
    def _writeback():
        out_ref[...] = acc_ref[...].astype(out_ref.dtype)


def embedding_layer(sentence, emb_table, *, chunk=512):
    """sentence: [seq_len, batch] int; emb_table: [vocab, dim] float.

    Returns [batch, seq_len, dim] (matches the torch forward exactly).
    """
    seq_len, batch = sentence.shape
    vocab, dim = emb_table.shape
    n_tok = seq_len * batch

    dtype = emb_table.dtype
    itemsize = dtype.itemsize

    # --- index plumbing (wrapper-side, cheap XLA ops) -----------------------
    # out[b, s, :] = table[sentence[s, b]]  ->  flat order is sentence.T
    idx = jnp.transpose(sentence).reshape(-1).astype(jnp.int32)
    # NOTE: torch raises on out-of-range ids; we clamp them to valid rows.
    idx = jnp.clip(idx, 0, vocab - 1)

    # --- layout / tiling decisions ------------------------------------------
    dp = _round_up(dim, 128)                      # lane-dense output & table
    cap = _vmem_capacity_bytes()
    table_budget = min(cap // 4, 24 * 1024 * 1024)

    vp_resident = _round_up(vocab, 256)           # full-lane / full-depth MXU
    if vp_resident * dp * itemsize <= table_budget:
        # Small table: VMEM-resident, single-buffered (constant block index).
        tv = vp_resident
        n_table_bufs = 1
    else:
        # Medium/large table: stream vocab blocks along an inner grid axis.
        # TODO(synk): for very large vocabularies a DMA-gather path
        # (memory_space=pl.ANY table + per-row pltpu.make_async_copy) avoids
        # re-streaming the table once per token chunk.
        tv = (2 * 1024 * 1024) // (dp * itemsize)
        tv = int(max(256, min((tv // 256) * 256, 2048)))
        n_table_bufs = 2
    vp = _round_up(vocab, tv)
    n_vblocks = vp // tv

    # Chunk size: shrink for short inputs; bound the (T, tv) onehot tile.
    t = min(chunk, _round_up(n_tok, 8))
    onehot_budget = 4 * 1024 * 1024
    t = min(t, max(8, ((onehot_budget // (tv * 4)) // 8) * 8))
    n_chunks = pl.cdiv(n_tok, t)
    n_pad = n_chunks * t
    idx = jnp.pad(idx, (0, n_pad - n_tok)).reshape(n_pad, 1)

    table = jnp.pad(emb_table, ((0, vp - vocab), (0, dp - dim)))

    # --- VMEM accounting (generation-aware) ---------------------------------
    est = (
        n_table_bufs * tv * dp * itemsize   # table block buffer(s)
        + 2 * t * dp * itemsize             # double-buffered output tile
        + 2 * t * 128 * 4                   # idx block (lane-padded int32)
        + t * dp * 4                        # f32 accumulator scratch
        + 3 * t * tv * 4                    # iota / mask / onehot live values
    )
    budget = (9 * cap) // 10
    if est > budget:
        # TODO(synk): tile the embed dim / use the DMA-gather path when even
        # a single (tv, dp) block plus working set exceeds VMEM.
        raise NotImplementedError(
            f"embedding tile footprint exceeds VMEM budget ({est} > {budget})"
        )
    vmem_limit = int(min(budget, max(32 * 1024 * 1024, est + 8 * 1024 * 1024)))

    table_spec_kw = {}
    if n_vblocks == 1:
        # Constant block index -> single buffer (halves resident-table VMEM).
        table_spec_kw["pipeline_mode"] = pl.Buffered(1)

    grid_spec = pltpu.PrefetchScalarGridSpec(
        num_scalar_prefetch=0,
        grid=(n_chunks, n_vblocks),
        in_specs=[
            pl.BlockSpec((t, 1), lambda i, k: (i, 0)),              # token ids
            pl.BlockSpec((tv, dp), lambda i, k: (k, 0), **table_spec_kw),
        ],
        out_specs=pl.BlockSpec((t, dp), lambda i, k: (i, 0)),
        scratch_shapes=[pltpu.VMEM((t, dp), jnp.float32)],
    )

    out_flat = pl.pallas_call(
        _embed_onehot_kernel,
        out_shape=jax.ShapeDtypeStruct((n_pad, dp), dtype),
        grid_spec=grid_spec,
        compiler_params=pltpu.CompilerParams(
            dimension_semantics=("parallel", "arbitrary"),
            vmem_limit_bytes=vmem_limit,
        ),
    )(idx, table)

    # Strip token / lane padding and restore [batch, seq, dim].
    return out_flat[:n_tok, :dim].reshape(batch, seq_len, dim)


if __name__ == "__main__":
    key = jax.random.PRNGKey(0)
    k_emb, k_idx = jax.random.split(key)

    vocab_size = 50
    embedding_dim = 32
    seq_len = 8
    batch_size = 2

    # Deterministic "pretrained" embedding table (stands in for pretrained_vec).
    pretrained_vec = jax.random.normal(
        k_emb, (vocab_size, embedding_dim), dtype=jnp.float32
    )

    # sentence: [seq_len, batch_size] integer token ids.
    sentence = jax.random.randint(
        k_idx, (seq_len, batch_size), 0, vocab_size, dtype=jnp.int32
    )

    out = embedding_layer(sentence, pretrained_vec)
    out = jax.block_until_ready(out)

    # Reference: pure-JAX gather + transpose, identical to torch forward.
    ref = jnp.transpose(pretrained_vec[sentence], (1, 0, 2))
    assert out.shape == (batch_size, seq_len, embedding_dim), out.shape
    assert jnp.allclose(out, ref), "mismatch vs reference gather"

    print("KERNEL_OK")
</pallas_src>

<mosaic_0001>
module attributes {stable_mosaic.version = 11 : i64} {
  func.func @_embed_onehot_kernel(%arg0: i32, %arg1: i32, %arg2: memref<16x1xi32, #tpu.memory_space<vmem>>, %arg3: memref<256x128xf32, #tpu.memory_space<vmem>>, %arg4: memref<16x128xf32, #tpu.memory_space<vmem>>, %arg5: memref<16x128xf32, #tpu.memory_space<vmem>>) attributes {dimension_semantics = [#tpu.dimension_semantics<parallel>, #tpu.dimension_semantics<arbitrary>], iteration_bounds = array<i64: 1, 1>, scalar_prefetch = 0 : i64, scratch_operands = 1 : i64, tpu.core_type = #tpu.core_type<tc>, window_params = [{transform_indices = @transform_0, window_bounds = array<i64: 16, 1>}, {pipeline_mode = #tpu.pipeline_mode<synchronous>, transform_indices = @transform_1, window_bounds = array<i64: 256, 128>}, {transform_indices = @transform_2, window_bounds = array<i64: 16, 128>}]} {
    %c0_i32 = arith.constant 0 : i32
    %0 = arith.cmpi eq, %arg1, %c0_i32 : i32
    %1 = arith.extui %0 : i1 to i32
    %c0_i32_0 = arith.constant 0 : i32
    %2 = arith.cmpi ne, %1, %c0_i32_0 : i32
    scf.if %2 {
      %cst_10 = arith.constant 0.000000e+00 : f32
      %20 = vector.broadcast %cst_10 : f32 to vector<16x128xf32>
      %c0_11 = arith.constant 0 : index
      %c0_12 = arith.constant 0 : index
      %21 = vector.load %arg5[%c0_11, %c0_12] : memref<16x128xf32, #tpu.memory_space<vmem>>, vector<16x128xf32>
      tpu.vector_store %arg5[%c0_11, %c0_12], %20 {strides = array<i32>} : memref<16x128xf32, #tpu.memory_space<vmem>>, vector<16x128xf32>,
    } else {
    }
    %c0 = arith.constant 0 : index
    %c0_1 = arith.constant 0 : index
    %3 = vector.load %arg2[%c0, %c0_1] : memref<16x1xi32, #tpu.memory_space<vmem>>, vector<16x1xi32>
    %c256_i32 = arith.constant 256 : i32
    %4 = arith.muli %arg1, %c256_i32 : i32
    %5 = vector.broadcast %4 : i32 to vector<16x1xi32>
    %6 = arith.subi %3, %5 : vector<16x1xi32>
    %7 = tpu.iota {dimensions = array<i32: 1>} : vector<16x256xi32>
    %8 = vector.broadcast %6 : vector<16x1xi32> to vector<16x256xi32>
    %9 = arith.cmpi eq, %8, %7 : vector<16x256xi32>
    %10 = arith.extui %9 : vector<16x256xi1> to vector<16x256xi32>
    %11 = arith.sitofp %10 : vector<16x256xi32> to vector<16x256xf32>
    %c0_2 = arith.constant 0 : index
    %c0_3 = arith.constant 0 : index
    %12 = vector.load %arg5[%c0_2, %c0_3] : memref<16x128xf32, #tpu.memory_space<vmem>>, vector<16x128xf32>
    %c0_4 = arith.constant 0 : index
    %c0_5 = arith.constant 0 : index
    %13 = vector.load %arg3[%c0_4, %c0_5] : memref<256x128xf32, #tpu.memory_space<vmem>>, vector<256x128xf32>
    %cst = arith.constant dense<0.000000e+00> : vector<16x128xf32>
    %14 = tpu.matmul %11, %13, %cst {dimension_numbers = #tpu.dot_dimension_numbers<[1], [0], [0], [1], [0, 0, 1, 1], [], []>} : vector<16x256xf32>, vector<256x128xf32>, vector<16x128xf32> -> vector<16x128xf32>
    %15 = arith.addf %12, %14 : vector<16x128xf32>
    %c0_6 = arith.constant 0 : index
    %c0_7 = arith.constant 0 : index
    %16 = vector.load %arg5[%c0_6, %c0_7] : memref<16x128xf32, #tpu.memory_space<vmem>>, vector<16x128xf32>
    tpu.vector_store %arg5[%c0_6, %c0_7], %15 {strides = array<i32>} : memref<16x128xf32, #tpu.memory_space<vmem>>, vector<16x128xf32>,
    %c0_i32_8 = arith.constant 0 : i32
    %17 = arith.cmpi eq, %arg1, %c0_i32_8 : i32
    %18 = arith.extui %17 : i1 to i32
    %c0_i32_9 = arith.constant 0 : i32
    %19 = arith.cmpi ne, %18, %c0_i32_9 : i32
    scf.if %19 {
      %c0_10 = arith.constant 0 : index
      %c0_11 = arith.constant 0 : index
      %20 = vector.load %arg5[%c0_10, %c0_11] : memref<16x128xf32, #tpu.memory_space<vmem>>, vector<16x128xf32>
      %c0_12 = arith.constant 0 : index
      %c0_13 = arith.constant 0 : index
      %21 = vector.load %arg4[%c0_12, %c0_13] : memref<16x128xf32, #tpu.memory_space<vmem>>, vector<16x128xf32>
      tpu.vector_store %arg4[%c0_12, %c0_13], %20 {strides = array<i32>} : memref<16x128xf32, #tpu.memory_space<vmem>>, vector<16x128xf32>,
    } else {
    }
    return
  }
  func.func @transform_0(%arg0: i32, %arg1: i32) -> (i32, i32) {
    %c0_i32 = arith.constant 0 : i32
    %c0_i32_0 = arith.constant 0 : i32
    return %arg0, %c0_i32 : i32, i32
  }
  func.func @transform_1(%arg0: i32, %arg1: i32) -> (i32, i32) {
    %c0_i32 = arith.constant 0 : i32
    %c0_i32_0 = arith.constant 0 : i32
    return %arg1, %c0_i32 : i32, i32
  }
  func.func @transform_2(%arg0: i32, %arg1: i32) -> (i32, i32) {
    %c0_i32 = arith.constant 0 : i32
    %c0_i32_0 = arith.constant 0 : i32
    return %arg0, %c0_i32 : i32, i32
  }
}

</mosaic_0001>

<llo_original>
// kernel: tpu_custom_call.1
$region0: #{tpu_custom_call.1}
  #allocation0 [shape = 'u32[]', space=smem, size = 0x4, offset = 0x4, fixed_abs, tag = 'smem constant byte address 0x4 - core index']
  #allocation1 [shape = 'u32[144,128]{1,0:T(1,128)}', space=vmem, size = 0x12000, scoped, tag = 'internal scratch']
  #allocation2 [shape = 'f32[16,128]{1,0:T(8,128)}', space=vmem, size = 0x2000, scoped, tag = 'scratch operand']
  %s0 = inlined_call_operand.vmem [shape: s32[16,1], index: 0, kind: input, shape index: {}]
  %s1 = inlined_call_operand.hbm [shape: f32[256,128], index: 1, kind: input, shape index: {}]
  %s2 = inlined_call_operand.hbm [shape: f32[16,128], index: 2, kind: output, shape index: {}]
  %s3 = sld [smem:[#allocation0]]
  $region30: #{tpu_custom_call.1} parent=0
    _
  %s5 = ssub.s32 1, %s3
  %s6 = scalar_select 0, %s5, %s3
  $region1: #{tpu_custom_call.1} parent=0
    #allocation3 [shape = 'u8[131072]{0}', space=vmem, size = 0x20000, scoped, tag = 'input window, operand 1, single buffered']
    #allocation4 [shape = 's32[1]{0}', space=sflag, size = 0x4, scoped, tag = 'scoped memory for tpu_custom_call.1']
    #allocation5 [shape = 's32[1]{0}', space=sflag, size = 0x4, scoped, tag = 'scoped memory for tpu_custom_call.1']
    #allocation6 [shape = 'u8[8192]{0}', space=vmem, size = 0x2000, scoped, tag = 'output window, operand 0, single buffered']
    %7 = vsyncpa [#allocation4], 0
    %8 = vsyncpa [#allocation5], 0
    // Predicated region
    $region2: #{tpu_custom_call.1} parent=1 // pred_check
      _
    $region3: #{tpu_custom_call.1} parent=1 // pred_check_branch
      %10 = sbr.rel (0) target = $region5
    $region4: #{tpu_custom_call.1} parent=1 // pred_region
      _
    $region5: #{tpu_custom_call.1} parent=1 // pred_fallthru
      _
    // Predicated region
    $region6: #{tpu_custom_call.1} parent=1 // pred_check
      _
    $region7: #{tpu_custom_call.1} parent=1 // pred_check_branch
      %12 = sbr.rel (0) target = $region9
    $region8: #{tpu_custom_call.1} parent=1 // pred_region
      %s14 = ssub.s32 4096, 4096
      %15 = vsyncadd [#allocation4], %s14
      %s16 = sshll.u32 [#allocation3], 4
      %s17 = int_to_ptr.vmem [resolvable:$true] %s16
      %22 = dma.hbm_to_vmem [thread:$0]  %s1, 4096, %s17, [#allocation4], 128, 128, 8
    $region9: #{tpu_custom_call.1} parent=1 // pred_fallthru
      _
    // Predicated region
    $region10: #{tpu_custom_call.1} parent=1 // pred_check
      _
    $region11: #{tpu_custom_call.1} parent=1 // pred_check_branch
      %24 = sbr.rel (0) target = $region13
    $region12: #{tpu_custom_call.1} parent=1 // pred_region
      %25 = dma.done [#allocation4], 4096
    $region13: #{tpu_custom_call.1} parent=1 // pred_fallthru
      _
    %p26 = scmp.eq.s32.totalorder 0, 0
    // Predicated region
    $region14: #{tpu_custom_call.1} parent=1 // pred_check
      %p27 = pneg %p26
    $region15: #{tpu_custom_call.1} parent=1 // pred_check_branch
      %29 = sbr.rel (%p27) target = $region17
    $region16: #{tpu_custom_call.1} parent=1 // pred_region
      %30 = vst [vmem:[#allocation2] sm:$0xff] 0.0
      %31 = vst [vmem:[#allocation2 + $0x8] sm:$0xff] 0.0
    $region17: #{tpu_custom_call.1} parent=1 // pred_fallthru
      _
    %v32 = vld [vmem:[%s0] sm:$0xff]
    %v33 = vld [vmem:[%s0 + $0x8] sm:$0xff]
    %s34 = smul.u32 0, 256
    %v35 = vstv %s34
    %v36 = vsub.s32 %v32, %v35
    %v37 = vsub.s32 %v33, %v35
    %v38 = vlaneseq
    %v39 = vand.u32 %v38, 127
    %v40 = vadd.s32 %v39, 128
    %41 = vset.pattern.permute.xlu0 0
    %42 = vperm.xlu0 %41, %v36
    %v43 = vpop.permute.xlu0 %42
    %44 = vset.pattern.permute.xlu0 0
    %45 = vperm.xlu0 %44, %v37
    %v46 = vpop.permute.xlu0 %45
    %vm47 = vcmp.eq.s32.totalorder %v43, %v39
    %vm48 = vcmp.eq.s32.totalorder %v43, %v40
    %vm49 = vcmp.eq.s32.totalorder %v46, %v39
    %vm50 = vcmp.eq.s32.totalorder %v46, %v40
    %v51 = vsel %vm47, 1, 0
    %v52 = vsel %vm48, 1, 0
    %v53 = vsel %vm49, 1, 0
    %v54 = vsel %vm50, 1, 0
    %v55 = vcvt.s32.f32 %v51
    %v56 = vcvt.s32.f32 %v52
    %v57 = vcvt.s32.f32 %v53
    %v58 = vcvt.s32.f32 %v54
    %v59 = vld [vmem:[#allocation2] sm:$0xff]
    %v60 = vld [vmem:[#allocation2 + $0x8] sm:$0xff]
    %v61 = vld [vmem:[#allocation3] sm:$0xff]
    %v62 = vld [vmem:[#allocation3 + $0x8] sm:$0xff]
    %v63 = vld [vmem:[#allocation3 + $0x10] sm:$0xff]
    %v64 = vld [vmem:[#allocation3 + $0x18] sm:$0xff]
    %v65 = vld [vmem:[#allocation3 + $0x20] sm:$0xff]
    %v66 = vld [vmem:[#allocation3 + $0x28] sm:$0xff]
    %v67 = vld [vmem:[#allocation3 + $0x30] sm:$0xff]
    %v68 = vld [vmem:[#allocation3 + $0x38] sm:$0xff]
    %v69 = vld [vmem:[#allocation3 + $0x40] sm:$0xff]
    %v70 = vld [vmem:[#allocation3 + $0x48] sm:$0xff]
    %v71 = vld [vmem:[#allocation3 + $0x50] sm:$0xff]
    %v72 = vld [vmem:[#allocation3 + $0x58] sm:$0xff]
    %v73 = vld [vmem:[#allocation3 + $0x60] sm:$0xff]
    %v74 = vld [vmem:[#allocation3 + $0x68] sm:$0xff]
    %v75 = vld [vmem:[#allocation3 + $0x70] sm:$0xff]
    %v76 = vld [vmem:[#allocation3 + $0x78] sm:$0xff]
    %v77 = vld [vmem:[#allocation3 + $0x80] sm:$0xff]
    %v78 = vld [vmem:[#allocation3 + $0x88] sm:$0xff]
    %v79 = vld [vmem:[#allocation3 + $0x90] sm:$0xff]
    %v80 = vld [vmem:[#allocation3 + $0x98] sm:$0xff]
    %v81 = vld [vmem:[#allocation3 + $0xa0] sm:$0xff]
    %v82 = vld [vmem:[#allocation3 + $0xa8] sm:$0xff]
    %v83 = vld [vmem:[#allocation3 + $0xb0] sm:$0xff]
    %v84 = vld [vmem:[#allocation3 + $0xb8] sm:$0xff]
    %v85 = vld [vmem:[#allocation3 + $0xc0] sm:$0xff]
    %v86 = vld [vmem:[#allocation3 + $0xc8] sm:$0xff]
    %v87 = vld [vmem:[#allocation3 + $0xd0] sm:$0xff]
    %v88 = vld [vmem:[#allocation3 + $0xd8] sm:$0xff]
    %v89 = vld [vmem:[#allocation3 + $0xe0] sm:$0xff]
    %v90 = vld [vmem:[#allocation3 + $0xe8] sm:$0xff]
    %v91 = vld [vmem:[#allocation3 + $0xf0] sm:$0xff]
    %v92 = vld [vmem:[#allocation3 + $0xf8] sm:$0xff]
    %93 = vmatprep.subr.mxu0 0.0
    %94 = vmatpush1.msra.mxu0 %v76
    %95 = vmatprep.subr.mxu0 0.0
    %96 = vmatpush1.msra.mxu0 %v75
    %97 = vmatprep.subr.mxu0 0.0
    %98 = vmatpush1.msra.mxu0 %v74
    %99 = vmatprep.subr.mxu0 0.0
    %100 = vmatpush1.msra.mxu0 %v73
    %101 = vmatprep.subr.mxu0 0.0
    %102 = vmatpush1.msra.mxu0 %v72
    %103 = vmatprep.subr.mxu0 0.0
    %104 = vmatpush1.msra.mxu0 %v71
    %105 = vmatprep.subr.mxu0 0.0
    %106 = vmatpush1.msra.mxu0 %v70
    %107 = vmatprep.subr.mxu0 0.0
    %108 = vmatpush1.msra.mxu0 %v69
    %109 = vmatprep.subr.mxu0 0.0
    %110 = vmatpush1.msra.mxu0 %v68
    %111 = vmatprep.subr.mxu0 0.0
    %112 = vmatpush1.msra.mxu0 %v67
    %113 = vmatprep.subr.mxu0 0.0
    %114 = vmatpush1.msra.mxu0 %v66
    %115 = vmatprep.subr.mxu0 0.0
    %116 = vmatpush1.msra.mxu0 %v65
    %117 = vmatprep.subr.mxu0 0.0
    %118 = vmatpush1.msra.mxu0 %v64
    %119 = vmatprep.subr.mxu0 0.0
    %120 = vmatpush1.msra.mxu0 %v63
    %121 = vmatprep.subr.mxu0 0.0
    %122 = vmatpush1.msra.mxu0 %v62
    %123 = vmatprep.subr.mxu0 0.0
    %124 = vmatpush1.msra.mxu0 %v61
    %125 = vmatprep.subr.mxu0 0.0
    %126 = vmatpush2.msra.mxu0 %v92
    %127 = vmatprep.subr.mxu0 0.0
    %128 = vmatpush2.msra.mxu0 %v91
    %129 = vmatprep.subr.mxu0 0.0
    %130 = vmatpush2.msra.mxu0 %v90
    %131 = vmatprep.subr.mxu0 0.0
    %132 = vmatpush2.msra.mxu0 %v89
    %133 = vmatprep.subr.mxu0 0.0
    %134 = vmatpush2.msra.mxu0 %v88
    %135 = vmatprep.subr.mxu0 0.0
    %136 = vmatpush2.msra.mxu0 %v87
    %137 = vmatprep.subr.mxu0 0.0
    %138 = vmatpush2.msra.mxu0 %v86
    %139 = vmatprep.subr.mxu0 0.0
    %140 = vmatpush2.msra.mxu0 %v85
    %141 = vmatprep.subr.mxu0 0.0
    %142 = vmatpush2.msra.mxu0 %v84
    %143 = vmatprep.subr.mxu0 0.0
    %144 = vmatpush2.msra.mxu0 %v83
    %145 = vmatprep.subr.mxu0 0.0
    %146 = vmatpush2.msra.mxu0 %v82
    %147 = vmatprep.subr.mxu0 0.0
    %148 = vmatpush2.msra.mxu0 %v81
    %149 = vmatprep.subr.mxu0 0.0
    %150 = vmatpush2.msra.mxu0 %v80
    %151 = vmatprep.subr.mxu0 0.0
    %152 = vmatpush2.msra.mxu0 %v79
    %153 = vmatprep.subr.mxu0 0.0
    %154 = vmatpush2.msra.mxu0 %v78
    %155 = vmatprep.subr.mxu0 0.0
    %156 = vmatpush2.msra.mxu0 %v77
    %157 = vmatprep.mubr.f32.mxu0 %v56
    %158 = vmatmul.mubr.f32.gmra.mxu0 %v55
    %v159 = vpop.f32.mrf.mxu0
    %v160 = vadd.f32 0.0, %v159
    %v161 = vpop.f32.mrf.mxu0
    %162 = vmatprep.mubr.f32.mxu0 %v58
    %163 = vmatmul.mubr.f32.gmra.mxu0 %v57
    %v164 = vpop.f32.mrf.mxu0
    %v165 = vadd.f32 0.0, %v164
    %v166 = vpop.f32.mrf.mxu0
    %167 = vdwg.mxu0
    %v168 = vadd.f32 %v59, %v160
    %v169 = vadd.f32 %v60, %v165
    %170 = vst [vmem:[#allocation2] sm:$0xff] %v168
    %171 = vst [vmem:[#allocation2 + $0x8] sm:$0xff] %v169
    // Predicated region
    $region18: #{tpu_custom_call.1} parent=1 // pred_check
      %p172 = pneg %p26
    $region19: #{tpu_custom_call.1} parent=1 // pred_check_branch
      %174 = sbr.rel (%p172) target = $region21
    $region20: #{tpu_custom_call.1} parent=1 // pred_region
      %v175 = vld [vmem:[#allocation2] sm:$0xff]
      %v176 = vld [vmem:[#allocation2 + $0x8] sm:$0xff]
      %177 = vst [vmem:[#allocation6] sm:$0xff] %v175
      %178 = vst [vmem:[#allocation6 + $0x8] sm:$0xff] %v176
    $region21: #{tpu_custom_call.1} parent=1 // pred_fallthru
      _
    // Predicated region
    $region22: #{tpu_custom_call.1} parent=1 // pred_check
      _
    $region23: #{tpu_custom_call.1} parent=1 // pred_check_branch
      %180 = sbr.rel (0) target = $region25
    $region24: #{tpu_custom_call.1} parent=1 // pred_region
      %s182 = ssub.s32 256, 256
      %183 = vsyncadd [#allocation5], %s182
      %s184 = sshll.u32 [#allocation6], 4
      %s185 = int_to_ptr.vmem [resolvable:$true] %s184
      %190 = dma.vmem_to_hbm [thread:$0]  %s185, 256, %s2, [#allocation5], 128, 128, 8
    $region25: #{tpu_custom_call.1} parent=1 // pred_fallthru
      _
    // Predicated region
    $region26: #{tpu_custom_call.1} parent=1 // pred_check
      _
    $region27: #{tpu_custom_call.1} parent=1 // pred_check_branch
      %192 = sbr.rel (0) target = $region29
    $region28: #{tpu_custom_call.1} parent=1 // pred_region
      %193 = dma.done [#allocation5], 256
    $region29: #{tpu_custom_call.1} parent=1 // pred_fallthru
      _
    %194 = vsyncpa [#allocation4], 1
    %195 = vsyncpa [#allocation5], 1

</llo_original>
